<compile_context>
chip_gen: v6e
topology: v6e:2x2x1
jax: 0.10.0
libtpu: 0.0.40
codegen_flags: <defaults>
</compile_context>

<pallas_src>
import functools

import jax
import jax.numpy as jnp
from jax.experimental import pallas as pl
from jax.experimental.pallas import tpu as pltpu


def _round_up(x, m):
    return ((x + m - 1) // m) * m


def _mf_kernel(uid_ref, iid_ref, ut_ref, it_ref, w_ref, o_ref, *, num_users, num_items):
    # uid_ref, iid_ref : (1, tb)  int32 indices for this batch tile
    # ut_ref           : (D, U)   transposed user embedding table (VMEM resident)
    # it_ref           : (D, I)   transposed item embedding table (VMEM resident)
    # w_ref            : (D, 1)   fc weight as a column (nn.Linear weight (1, D) transposed)
    # o_ref            : (1, tb)  lane-dense sigmoid(logits) tile
    tb = o_ref.shape[1]

    uid = uid_ref[...]                                            # (1, tb)
    iid = iid_ref[...]                                            # (1, tb)

    # Fused gather: one-hot selection matrices, batch on lanes.
    u_rows = jax.lax.broadcasted_iota(jnp.int32, (num_users, tb), 0)
    i_rows = jax.lax.broadcasted_iota(jnp.int32, (num_items, tb), 0)
    u_onehot = jnp.where(u_rows == uid, 1.0, 0.0).astype(jnp.float32)   # (U, tb)
    i_onehot = jnp.where(i_rows == iid, 1.0, 0.0).astype(jnp.float32)   # (I, tb)

    u_t = jnp.dot(ut_ref[...], u_onehot, preferred_element_type=jnp.float32)  # (D, tb)
    v_t = jnp.dot(it_ref[...], i_onehot, preferred_element_type=jnp.float32)  # (D, tb)

    # interaction * fc weight, reduced over D (sublane reduce); sigmoid on the EUP.
    logits = jnp.sum(u_t * v_t * w_ref[...], axis=0, keepdims=True)            # (1, tb)
    o_ref[...] = jax.nn.sigmoid(logits)


def mf_forward(user_indices, item_indices, user_emb, item_emb, fc_weight, *, tb=512):
    """Matrix-factorization forward pass.

    user_indices, item_indices : int (B,)
    user_emb : (num_users, D)   item_emb : (num_items, D)   fc_weight : (1, D)
    returns  : float32 (B,)
    """
    B = int(user_indices.shape[0])
    num_users, D = user_emb.shape
    num_items = item_emb.shape[0]

    # Batch tile: multiple of 128 lanes; pad batch to a multiple of the tile.
    tb = _round_up(min(tb, _round_up(B, 128)), 128)
    b_pad = _round_up(B, tb)
    pad = b_pad - B

    uid = jnp.pad(user_indices.astype(jnp.int32), (0, pad)).reshape(1, b_pad)
    iid = jnp.pad(item_indices.astype(jnp.int32), (0, pad)).reshape(1, b_pad)

    ut = user_emb.astype(jnp.float32).T                 # (D, U)
    it = item_emb.astype(jnp.float32).T                 # (D, I)
    w_col = fc_weight.astype(jnp.float32).reshape(1, D).T   # (D, 1)

    kernel = functools.partial(_mf_kernel, num_users=num_users, num_items=num_items)

    out = pl.pallas_call(
        kernel,
        out_shape=jax.ShapeDtypeStruct((1, b_pad), jnp.float32),
        grid_spec=pltpu.PrefetchScalarGridSpec(
            num_scalar_prefetch=0,
            grid=(b_pad // tb,),
            in_specs=[
                pl.BlockSpec((1, tb), lambda i: (0, i)),            # user index tile
                pl.BlockSpec((1, tb), lambda i: (0, i)),            # item index tile
                pl.BlockSpec((D, num_users), lambda i: (0, 0)),     # user table (whole, resident)
                pl.BlockSpec((D, num_items), lambda i: (0, 0)),     # item table (whole, resident)
                pl.BlockSpec((D, 1), lambda i: (0, 0)),             # fc weight column (shared)
            ],
            out_specs=pl.BlockSpec((1, tb), lambda i: (0, i)),
        ),
        compiler_params=pltpu.CompilerParams(
            dimension_semantics=("parallel",),
        ),
    )(uid, iid, ut, it, w_col)

    return out[0, :B]                                   # squeeze -> (B,)


def _reference(user_indices, item_indices, user_emb, item_emb, fc_weight):
    u = user_emb[user_indices]
    v = item_emb[item_indices]
    logits = (u * v) @ fc_weight.T
    return jax.nn.sigmoid(logits)[:, 0]


if __name__ == "__main__":
    num_users, num_items, latent_dim = 32, 48, 10
    batch = 8

    key = jax.random.PRNGKey(0)
    k_u, k_i, k_w, k_ui, k_ii = jax.random.split(key, 5)

    # Deterministic parameter init matching nn.init.normal_(mean=0, std=0.01).
    user_emb = 0.01 * jax.random.normal(k_u, (num_users, latent_dim), dtype=jnp.float32)
    item_emb = 0.01 * jax.random.normal(k_i, (num_items, latent_dim), dtype=jnp.float32)
    fc_weight = 0.01 * jax.random.normal(k_w, (1, latent_dim), dtype=jnp.float32)

    user_indices = jax.random.randint(k_ui, (batch,), 0, num_users, dtype=jnp.int32)
    item_indices = jax.random.randint(k_ii, (batch,), 0, num_items, dtype=jnp.int32)

    out = mf_forward(user_indices, item_indices, user_emb, item_emb, fc_weight)
    out = jax.block_until_ready(out)

    ref = _reference(user_indices, item_indices, user_emb, item_emb, fc_weight)
    assert out.shape == (batch,)
    assert jnp.allclose(out, ref, atol=1e-6, rtol=1e-6), (out, ref)

    print("KERNEL_OK")
</pallas_src>

<mosaic_0001>
module attributes {stable_mosaic.version = 11 : i64} {
  func.func @_mf_kernel(%arg0: i32, %arg1: memref<1x128xi32, #tpu.memory_space<vmem>>, %arg2: memref<1x128xi32, #tpu.memory_space<vmem>>, %arg3: memref<10x32xf32, #tpu.memory_space<vmem>>, %arg4: memref<10x48xf32, #tpu.memory_space<vmem>>, %arg5: memref<10x1xf32, #tpu.memory_space<vmem>>, %arg6: memref<1x128xf32, #tpu.memory_space<vmem>>) attributes {dimension_semantics = [#tpu.dimension_semantics<parallel>], iteration_bounds = array<i64: 1>, scalar_prefetch = 0 : i64, scratch_operands = 0 : i64, tpu.core_type = #tpu.core_type<tc>, window_params = [{transform_indices = @transform_0, window_bounds = array<i64: 1, 128>}, {transform_indices = @transform_1, window_bounds = array<i64: 1, 128>}, {pipeline_mode = #tpu.pipeline_mode<synchronous>, transform_indices = @transform_2, window_bounds = array<i64: 10, 32>}, {pipeline_mode = #tpu.pipeline_mode<synchronous>, transform_indices = @transform_3, window_bounds = array<i64: 10, 48>}, {pipeline_mode = #tpu.pipeline_mode<synchronous>, transform_indices = @transform_4, window_bounds = array<i64: 10, 1>}, {transform_indices = @transform_5, window_bounds = array<i64: 1, 128>}]} {
    %c0 = arith.constant 0 : index
    %c0_0 = arith.constant 0 : index
    %0 = vector.load %arg1[%c0, %c0_0] : memref<1x128xi32, #tpu.memory_space<vmem>>, vector<1x128xi32>
    %c0_1 = arith.constant 0 : index
    %c0_2 = arith.constant 0 : index
    %1 = vector.load %arg2[%c0_1, %c0_2] : memref<1x128xi32, #tpu.memory_space<vmem>>, vector<1x128xi32>
    %2 = tpu.iota {dimensions = array<i32: 0>} : vector<32x128xi32>
    %3 = tpu.iota {dimensions = array<i32: 0>} : vector<48x128xi32>
    %4 = vector.broadcast %0 : vector<1x128xi32> to vector<32x128xi32>
    %5 = arith.cmpi eq, %2, %4 : vector<32x128xi32>
    %cst = arith.constant 1.000000e+00 : f32
    %cst_3 = arith.constant 0.000000e+00 : f32
    %6 = vector.broadcast %cst : f32 to vector<32x128xf32>
    %7 = vector.broadcast %cst_3 : f32 to vector<32x128xf32>
    %8 = arith.select %5, %6, %7 : vector<32x128xi1>, vector<32x128xf32>
    %9 = vector.broadcast %1 : vector<1x128xi32> to vector<48x128xi32>
    %10 = arith.cmpi eq, %3, %9 : vector<48x128xi32>
    %cst_4 = arith.constant 1.000000e+00 : f32
    %cst_5 = arith.constant 0.000000e+00 : f32
    %11 = vector.broadcast %cst_4 : f32 to vector<48x128xf32>
    %12 = vector.broadcast %cst_5 : f32 to vector<48x128xf32>
    %13 = arith.select %10, %11, %12 : vector<48x128xi1>, vector<48x128xf32>
    %c0_6 = arith.constant 0 : index
    %c0_7 = arith.constant 0 : index
    %14 = vector.load %arg3[%c0_6, %c0_7] : memref<10x32xf32, #tpu.memory_space<vmem>>, vector<10x32xf32>
    %cst_8 = arith.constant dense<0.000000e+00> : vector<10x128xf32>
    %15 = tpu.matmul %14, %8, %cst_8 {dimension_numbers = #tpu.dot_dimension_numbers<[1], [0], [0], [1], [0, 0, 1, 1], [], []>} : vector<10x32xf32>, vector<32x128xf32>, vector<10x128xf32> -> vector<10x128xf32>
    %c0_9 = arith.constant 0 : index
    %c0_10 = arith.constant 0 : index
    %16 = vector.load %arg4[%c0_9, %c0_10] : memref<10x48xf32, #tpu.memory_space<vmem>>, vector<10x48xf32>
    %cst_11 = arith.constant dense<0.000000e+00> : vector<10x128xf32>
    %17 = tpu.matmul %16, %13, %cst_11 {dimension_numbers = #tpu.dot_dimension_numbers<[1], [0], [0], [1], [0, 0, 1, 1], [], []>} : vector<10x48xf32>, vector<48x128xf32>, vector<10x128xf32> -> vector<10x128xf32>
    %18 = arith.mulf %15, %17 : vector<10x128xf32>
    %c0_12 = arith.constant 0 : index
    %c0_13 = arith.constant 0 : index
    %19 = vector.load %arg5[%c0_12, %c0_13] : memref<10x1xf32, #tpu.memory_space<vmem>>, vector<10x1xf32>
    %20 = vector.broadcast %19 : vector<10x1xf32> to vector<10x128xf32>
    %21 = arith.mulf %18, %20 : vector<10x128xf32>
    %cst_14 = arith.constant dense<0.000000e+00> : vector<128xf32>
    %22 = vector.multi_reduction <add>, %21, %cst_14 [0] : vector<10x128xf32> to vector<128xf32>
    %23 = vector.shape_cast %22 : vector<128xf32> to vector<1x128xf32>
    %24 = arith.negf %23 : vector<1x128xf32>
    %25 = math.exp %24 : vector<1x128xf32>
    %cst_15 = arith.constant 1.000000e+00 : f32
    %26 = vector.broadcast %cst_15 : f32 to vector<1x128xf32>
    %27 = arith.addf %26, %25 : vector<1x128xf32>
    %28 = arith.divf %26, %27 : vector<1x128xf32>
    %c0_16 = arith.constant 0 : index
    %c0_17 = arith.constant 0 : index
    %29 = vector.load %arg6[%c0_16, %c0_17] : memref<1x128xf32, #tpu.memory_space<vmem>>, vector<1x128xf32>
    tpu.vector_store %arg6[%c0_16, %c0_17], %28 {strides = array<i32>} : memref<1x128xf32, #tpu.memory_space<vmem>>, vector<1x128xf32>,
    return
  }
  func.func @transform_0(%arg0: i32) -> (i32, i32) {
    %c0_i32 = arith.constant 0 : i32
    %c0_i32_0 = arith.constant 0 : i32
    return %c0_i32, %arg0 : i32, i32
  }
  func.func @transform_1(%arg0: i32) -> (i32, i32) {
    %c0_i32 = arith.constant 0 : i32
    %c0_i32_0 = arith.constant 0 : i32
    return %c0_i32, %arg0 : i32, i32
  }
  func.func @transform_2(%arg0: i32) -> (i32, i32) {
    %c0_i32 = arith.constant 0 : i32
    %c0_i32_0 = arith.constant 0 : i32
    %c0_i32_1 = arith.constant 0 : i32
    return %c0_i32, %c0_i32_0 : i32, i32
  }
  func.func @transform_3(%arg0: i32) -> (i32, i32) {
    %c0_i32 = arith.constant 0 : i32
    %c0_i32_0 = arith.constant 0 : i32
    %c0_i32_1 = arith.constant 0 : i32
    return %c0_i32, %c0_i32_0 : i32, i32
  }
  func.func @transform_4(%arg0: i32) -> (i32, i32) {
    %c0_i32 = arith.constant 0 : i32
    %c0_i32_0 = arith.constant 0 : i32
    %c0_i32_1 = arith.constant 0 : i32
    return %c0_i32, %c0_i32_0 : i32, i32
  }
  func.func @transform_5(%arg0: i32) -> (i32, i32) {
    %c0_i32 = arith.constant 0 : i32
    %c0_i32_0 = arith.constant 0 : i32
    return %c0_i32, %arg0 : i32, i32
  }
}

</mosaic_0001>

<llo_original>
// kernel: tpu_custom_call.1
$region0: #{tpu_custom_call.1}
  #allocation0 [shape = 'u32[]', space=smem, size = 0x4, offset = 0x4, fixed_abs, tag = 'smem constant byte address 0x4 - core index']
  #allocation1 [shape = 'u32[144,128]{1,0:T(1,128)}', space=vmem, size = 0x12000, scoped, tag = 'internal scratch']
  %s0 = inlined_call_operand.vmem [shape: s32[1,128], index: 0, kind: input, shape index: {}]
  %s1 = inlined_call_operand.vmem [shape: s32[1,128], index: 1, kind: input, shape index: {}]
  %s2 = inlined_call_operand.vmem [shape: f32[10,32], index: 2, kind: input, shape index: {}]
  %s3 = inlined_call_operand.hbm [shape: f32[10,48], index: 3, kind: input, shape index: {}]
  %s4 = inlined_call_operand.vmem [shape: f32[10,1], index: 4, kind: input, shape index: {}]
  %s5 = inlined_call_operand.hbm [shape: f32[1,128], index: 5, kind: output, shape index: {}]
  %s6 = sld [smem:[#allocation0]]
  $region34: #{tpu_custom_call.1} parent=0
    _
  %s8 = ssub.s32 1, %s6
  %s9 = scalar_select 0, %s8, %s6
  $region1: #{tpu_custom_call.1} parent=0
    #allocation2 [shape = 'u8[8192]{0}', space=vmem, size = 0x2000, scoped, tag = 'input window, operand 3, single buffered']
    #allocation3 [shape = 's32[1]{0}', space=sflag, size = 0x4, scoped, tag = 'scoped memory for tpu_custom_call.1']
    #allocation4 [shape = 's32[1]{0}', space=sflag, size = 0x4, scoped, tag = 'scoped memory for tpu_custom_call.1']
    #allocation5 [shape = 'u8[512]{0}', space=vmem, size = 0x400, scoped, tag = 'output window, operand 0, single buffered']
    %10 = vsyncpa [#allocation3], 0
    %11 = vsyncpa [#allocation4], 0
    // Predicated region
    $region2: #{tpu_custom_call.1} parent=1 // pred_check
      _
    $region3: #{tpu_custom_call.1} parent=1 // pred_check_branch
      %13 = sbr.rel (0) target = $region5
    $region4: #{tpu_custom_call.1} parent=1 // pred_region
      _
    $region5: #{tpu_custom_call.1} parent=1 // pred_fallthru
      _
    // Predicated region
    $region6: #{tpu_custom_call.1} parent=1 // pred_check
      _
    $region7: #{tpu_custom_call.1} parent=1 // pred_check_branch
      %15 = sbr.rel (0) target = $region9
    $region8: #{tpu_custom_call.1} parent=1 // pred_region
      _
    $region9: #{tpu_custom_call.1} parent=1 // pred_fallthru
      _
    // Predicated region
    $region10: #{tpu_custom_call.1} parent=1 // pred_check
      _
    $region11: #{tpu_custom_call.1} parent=1 // pred_check_branch
      %17 = sbr.rel (0) target = $region13
    $region12: #{tpu_custom_call.1} parent=1 // pred_region
      _
    $region13: #{tpu_custom_call.1} parent=1 // pred_fallthru
      _
    // Predicated region
    $region14: #{tpu_custom_call.1} parent=1 // pred_check
      _
    $region15: #{tpu_custom_call.1} parent=1 // pred_check_branch
      %19 = sbr.rel (0) target = $region17
    $region16: #{tpu_custom_call.1} parent=1 // pred_region
      %s21 = ssub.s32 256, 256
      %22 = vsyncadd [#allocation3], %s21
      %s23 = sshll.u32 [#allocation2], 4
      %s24 = int_to_ptr.vmem [resolvable:$true] %s23
      %29 = dma.hbm_to_vmem [thread:$0]  %s3, 256, %s24, [#allocation3], 128, 128, 8
    $region17: #{tpu_custom_call.1} parent=1 // pred_fallthru
      _
    // Predicated region
    $region18: #{tpu_custom_call.1} parent=1 // pred_check
      _
    $region19: #{tpu_custom_call.1} parent=1 // pred_check_branch
      %31 = sbr.rel (0) target = $region21
    $region20: #{tpu_custom_call.1} parent=1 // pred_region
      _
    $region21: #{tpu_custom_call.1} parent=1 // pred_fallthru
      _
    // Predicated region
    $region22: #{tpu_custom_call.1} parent=1 // pred_check
      _
    $region23: #{tpu_custom_call.1} parent=1 // pred_check_branch
      %33 = sbr.rel (0) target = $region25
    $region24: #{tpu_custom_call.1} parent=1 // pred_region
      %34 = dma.done [#allocation3], 256
    $region25: #{tpu_custom_call.1} parent=1 // pred_fallthru
      _
    %v35 = vld [vmem:[%s0] sm:$0x1]
    %v36 = vld [vmem:[%s1] sm:$0x1]
    %v37 = vlaneseq
    %v38 = vshrl.u32 %v37, 7
    %v39 = vadd.s32 %v38, 8
    %v40 = vadd.s32 %v38, 16
    %v41 = vadd.s32 %v38, 24
    %v42 = vadd.s32 %v38, 32
    %v43 = vadd.s32 %v38, 40
    %v44 = vlaneseq
    %v45 = vshrl.u32 %v44, 7
    %v46 = vsub.s32 0, %v45
    %v47 = vrot.slane %v35, %v46
    %vm48 = vcmp.eq.s32.totalorder %v38, %v47
    %vm49 = vcmp.eq.s32.totalorder %v39, %v47
    %vm50 = vcmp.eq.s32.totalorder %v40, %v47
    %vm51 = vcmp.eq.s32.totalorder %v41, %v47
    %v52 = vsel %vm48, 1.0, 0.0
    %v53 = vsel %vm49, 1.0, 0.0
    %v54 = vsel %vm50, 1.0, 0.0
    %v55 = vsel %vm51, 1.0, 0.0
    %v56 = vlaneseq
    %v57 = vshrl.u32 %v56, 7
    %v58 = vsub.s32 0, %v57
    %v59 = vrot.slane %v36, %v58
    %vm60 = vcmp.eq.s32.totalorder %v38, %v59
    %vm61 = vcmp.eq.s32.totalorder %v39, %v59
    %vm62 = vcmp.eq.s32.totalorder %v40, %v59
    %vm63 = vcmp.eq.s32.totalorder %v41, %v59
    %vm64 = vcmp.eq.s32.totalorder %v42, %v59
    %vm65 = vcmp.eq.s32.totalorder %v43, %v59
    %v66 = vsel %vm60, 1.0, 0.0
    %v67 = vsel %vm61, 1.0, 0.0
    %v68 = vsel %vm62, 1.0, 0.0
    %v69 = vsel %vm63, 1.0, 0.0
    %v70 = vsel %vm64, 1.0, 0.0
    %v71 = vsel %vm65, 1.0, 0.0
    %v72 = vld [vmem:[%s2] sm:$0xff]
    %v73 = vld [vmem:[%s2 + $0x8] sm:$0x3]
    %vm74 = vcmask 261120
    %v76 = vsel %vm74, %v72, 0
    %v79 = vsel %vm74, %v73, 0
    %81 = vmatprep.subr.mxu0 0.0
    %82 = vmatpush1.msra.mxu0 0.0
    %83 = vmatprep.subr.mxu0 0.0
    %84 = vmatpush1.msra.mxu0 0.0
    %85 = vmatprep.subr.mxu0 0.0
    %86 = vmatpush1.msra.mxu0 0.0
    %87 = vmatprep.subr.mxu0 0.0
    %88 = vmatpush1.msra.mxu0 0.0
    %89 = vmatprep.subr.mxu0 0.0
    %90 = vmatpush1.msra.mxu0 0.0
    %91 = vmatprep.subr.mxu0 0.0
    %92 = vmatpush1.msra.mxu0 0.0
    %93 = vmatprep.subr.mxu0 0.0
    %94 = vmatpush1.msra.mxu0 0.0
    %95 = vmatprep.subr.mxu0 0.0
    %96 = vmatpush1.msra.mxu0 0.0
    %97 = vmatprep.subr.mxu0 0.0
    %98 = vmatpush1.msra.mxu0 0.0
    %99 = vmatprep.subr.mxu0 0.0
    %100 = vmatpush1.msra.mxu0 0.0
    %101 = vmatprep.subr.mxu0 0.0
    %102 = vmatpush1.msra.mxu0 0.0
    %103 = vmatprep.subr.mxu0 0.0
    %104 = vmatpush1.msra.mxu0 0.0
    %105 = vmatprep.subr.mxu0 0.0
    %106 = vmatpush1.msra.mxu0 %v55
    %107 = vmatprep.subr.mxu0 0.0
    %108 = vmatpush1.msra.mxu0 %v54
    %109 = vmatprep.subr.mxu0 0.0
    %110 = vmatpush1.msra.mxu0 %v53
    %111 = vmatprep.subr.mxu0 0.0
    %112 = vmatpush1.msra.mxu0 %v52
    %113 = vmatprep.subr.mxu0 0.0
    %114 = vmatpush2.msra.mxu0 0.0
    %115 = vmatprep.subr.mxu0 0.0
    %116 = vmatpush2.msra.mxu0 0.0
    %117 = vmatprep.subr.mxu0 0.0
    %118 = vmatpush2.msra.mxu0 0.0
    %119 = vmatprep.subr.mxu0 0.0
    %120 = vmatpush2.msra.mxu0 0.0
    %121 = vmatprep.subr.mxu0 0.0
    %122 = vmatpush2.msra.mxu0 0.0
    %123 = vmatprep.subr.mxu0 0.0
    %124 = vmatpush2.msra.mxu0 0.0
    %125 = vmatprep.subr.mxu0 0.0
    %126 = vmatpush2.msra.mxu0 0.0
    %127 = vmatprep.subr.mxu0 0.0
    %128 = vmatpush2.msra.mxu0 0.0
    %129 = vmatprep.subr.mxu0 0.0
    %130 = vmatpush2.msra.mxu0 0.0
    %131 = vmatprep.subr.mxu0 0.0
    %132 = vmatpush2.msra.mxu0 0.0
    %133 = vmatprep.subr.mxu0 0.0
    %134 = vmatpush2.msra.mxu0 0.0
    %135 = vmatprep.subr.mxu0 0.0
    %136 = vmatpush2.msra.mxu0 0.0
    %137 = vmatprep.subr.mxu0 0.0
    %138 = vmatpush2.msra.mxu0 0.0
    %139 = vmatprep.subr.mxu0 0.0
    %140 = vmatpush2.msra.mxu0 0.0
    %141 = vmatprep.subr.mxu0 0.0
    %142 = vmatpush2.msra.mxu0 0.0
    %143 = vmatprep.subr.mxu0 0.0
    %144 = vmatpush2.msra.mxu0 0.0
    %145 = vmatprep.mubr.f32.mxu0 0.0
    %146 = vmatmul.mubr.f32.gmra.mxu0 %v76
    %v147 = vpop.f32.mrf.mxu0
    %v148 = vadd.f32 0.0, %v147
    %v149 = vpop.f32.mrf.mxu0
    %150 = vmatprep.mubr.f32.mxu0 0.0
    %151 = vmatmul.mubr.f32.gmra.mxu0 %v79
    %v152 = vpop.f32.mrf.mxu0
    %v153 = vadd.f32 0.0, %v152
    %v154 = vpop.f32.mrf.mxu0
    %155 = vdwg.mxu0
    %v156 = vld [vmem:[#allocation2] sm:$0xff]
    %v157 = vld [vmem:[#allocation2 + $0x8] sm:$0x3]
    %vm158 = vcmask 392192
    %v160 = vsel %vm158, %v156, 0
    %v163 = vsel %vm158, %v157, 0
    %165 = vmatprep.subr.mxu0 0.0
    %166 = vmatpush1.msra.mxu0 0.0
    %167 = vmatprep.subr.mxu0 0.0
    %168 = vmatpush1.msra.mxu0 0.0
    %169 = vmatprep.subr.mxu0 0.0
    %170 = vmatpush1.msra.mxu0 0.0
    %171 = vmatprep.subr.mxu0 0.0
    %172 = vmatpush1.msra.mxu0 0.0
    %173 = vmatprep.subr.mxu0 0.0
    %174 = vmatpush1.msra.mxu0 0.0
    %175 = vmatprep.subr.mxu0 0.0
    %176 = vmatpush1.msra.mxu0 0.0
    %177 = vmatprep.subr.mxu0 0.0
    %178 = vmatpush1.msra.mxu0 0.0
    %179 = vmatprep.subr.mxu0 0.0
    %180 = vmatpush1.msra.mxu0 0.0
    %181 = vmatprep.subr.mxu0 0.0
    %182 = vmatpush1.msra.mxu0 0.0
    %183 = vmatprep.subr.mxu0 0.0
    %184 = vmatpush1.msra.mxu0 0.0
    %185 = vmatprep.subr.mxu0 0.0
    %186 = vmatpush1.msra.mxu0 %v71
    %187 = vmatprep.subr.mxu0 0.0
    %188 = vmatpush1.msra.mxu0 %v70
    %189 = vmatprep.subr.mxu0 0.0
    %190 = vmatpush1.msra.mxu0 %v69
    %191 = vmatprep.subr.mxu0 0.0
    %192 = vmatpush1.msra.mxu0 %v68
    %193 = vmatprep.subr.mxu0 0.0
    %194 = vmatpush1.msra.mxu0 %v67
    %195 = vmatprep.subr.mxu0 0.0
    %196 = vmatpush1.msra.mxu0 %v66
    %197 = vmatprep.subr.mxu0 0.0
    %198 = vmatpush2.msra.mxu0 0.0
    %199 = vmatprep.subr.mxu0 0.0
    %200 = vmatpush2.msra.mxu0 0.0
    %201 = vmatprep.subr.mxu0 0.0
    %202 = vmatpush2.msra.mxu0 0.0
    %203 = vmatprep.subr.mxu0 0.0
    %204 = vmatpush2.msra.mxu0 0.0
    %205 = vmatprep.subr.mxu0 0.0
    %206 = vmatpush2.msra.mxu0 0.0
    %207 = vmatprep.subr.mxu0 0.0
    %208 = vmatpush2.msra.mxu0 0.0
    %209 = vmatprep.subr.mxu0 0.0
    %210 = vmatpush2.msra.mxu0 0.0
    %211 = vmatprep.subr.mxu0 0.0
    %212 = vmatpush2.msra.mxu0 0.0
    %213 = vmatprep.subr.mxu0 0.0
    %214 = vmatpush2.msra.mxu0 0.0
    %215 = vmatprep.subr.mxu0 0.0
    %216 = vmatpush2.msra.mxu0 0.0
    %217 = vmatprep.subr.mxu0 0.0
    %218 = vmatpush2.msra.mxu0 0.0
    %219 = vmatprep.subr.mxu0 0.0
    %220 = vmatpush2.msra.mxu0 0.0
    %221 = vmatprep.subr.mxu0 0.0
    %222 = vmatpush2.msra.mxu0 0.0
    %223 = vmatprep.subr.mxu0 0.0
    %224 = vmatpush2.msra.mxu0 0.0
    %225 = vmatprep.subr.mxu0 0.0
    %226 = vmatpush2.msra.mxu0 0.0
    %227 = vmatprep.subr.mxu0 0.0
    %228 = vmatpush2.msra.mxu0 0.0
    %229 = vmatprep.mubr.f32.mxu0 0.0
    %230 = vmatmul.mubr.f32.gmra.mxu0 %v160
    %v231 = vpop.f32.mrf.mxu0
    %v232 = vadd.f32 0.0, %v231
    %v233 = vpop.f32.mrf.mxu0
    %234 = vmatprep.mubr.f32.mxu0 0.0
    %235 = vmatmul.mubr.f32.gmra.mxu0 %v163
    %v236 = vpop.f32.mrf.mxu0
    %v237 = vadd.f32 0.0, %v236
    %v238 = vpop.f32.mrf.mxu0
    %239 = vdwg.mxu0
    %v240 = vmul.f32 %v148, %v232
    %v241 = vmul.f32 %v153, %v237
    %v242 = vld [vmem:[%s4] sm:$0xff]
    %v243 = vld [vmem:[%s4 + $0x8] sm:$0x3]
    %245 = vset.pattern.permute.xlu0 0
    %246 = vperm.xlu0 %245, %v242
    %v247 = vpop.permute.xlu0 %246
    %250 = vset.pattern.permute.xlu0 0
    %251 = vperm.xlu0 %250, %v243
    %v252 = vpop.permute.xlu0 %251
    %v254 = vmul.f32 %v240, %v247
    %v255 = vmul.f32 %v241, %v252
    %vm256 = vcmask 1041408
    %v257 = vsel %vm256, %v255, 0.0
    %v258 = vadd.f32 %v254, %v257
    %v259 = vrot.slane %v258, 4
    %v260 = vadd.f32 %v258, %v259
    %v261 = vrot.slane %v260, 2
    %v262 = vadd.f32 %v260, %v261
    %v263 = vrot.slane %v262, 1
    %v264 = vadd.f32 %v262, %v263
    %v265 = vxor.u32 %v264, 2147483648
    %v266 = vmul.f32 %v265, 1.442695
    %v267 = vpow.pop %v266
    %v268 = vadd.f32 %v267, 1.0
    %v269 = vrcp.pop %v268
    %v270 = vmul.f32 1.0, %v269
    %271 = vst [vmem:[#allocation5] sm:$0x1] %v270
    // Predicated region
    $region26: #{tpu_custom_call.1} parent=1 // pred_check
      _
    $region27: #{tpu_custom_call.1} parent=1 // pred_check_branch
      %273 = sbr.rel (0) target = $region29
    $region28: #{tpu_custom_call.1} parent=1 // pred_region
      %s275 = ssub.s32 16, 16
      %276 = vsyncadd [#allocation4], %s275
      %s278 = sshll.u32 [#allocation5], 4
      %s279 = int_to_ptr.vmem [resolvable:$true] %s278
      %281 = dma.vmem_to_hbm [thread:$0]  %s279, 16, %s5, [#allocation4]
    $region29: #{tpu_custom_call.1} parent=1 // pred_fallthru
      _
    // Predicated region
    $region30: #{tpu_custom_call.1} parent=1 // pred_check
      _
    $region31: #{tpu_custom_call.1} parent=1 // pred_check_branch
      %283 = sbr.rel (0) target = $region33
    $region32: #{tpu_custom_call.1} parent=1 // pred_region
      %284 = dma.done [#allocation4], 16
    $region33: #{tpu_custom_call.1} parent=1 // pred_fallthru
      _
    %285 = vsyncpa [#allocation3], 1
    %286 = vsyncpa [#allocation4], 1

</llo_original>
